<compile_context>
chip_gen: v7x
topology: tpu7x:2x2x1
jax: 0.10.0
libtpu: 0.0.40
codegen_flags: <defaults>
</compile_context>

<pallas_src>
import jax
import jax.numpy as jnp
from jax.experimental import pallas as pl
from jax.experimental.pallas import tpu as pltpu


def _pr_kernel(x_ref, w_ref, b_ref, o_ref):
    # x_ref: (TILE_B, H) native dtype (VMEM, streamed per grid step)
    # w_ref: (8, H)      native dtype (VMEM, resident; row 0 = weight, rows 1..7 zero)
    # b_ref: (1, 1) f32  (SMEM scalar)
    # o_ref: (1, TILE_B) lane-dense output row for this tile
    #
    # MXU matvec: contract over H with f32 accumulation; result row 0 is the logits row.
    # The kernel is DMA-bound, so the MXU (otherwise idle) does the reduce for free and the
    # epilogue stays lane-dense -- no f32 copy of the x tile is materialized.
    s = jax.lax.dot_general(
        w_ref[...], x_ref[...],
        dimension_numbers=(((1,), (1,)), ((), ())),
        preferred_element_type=jnp.float32,
        precision=jax.lax.Precision.HIGHEST,
    )                                             # (8, TILE_B) f32
    logits = s[0:1, :] + b_ref[0, 0]              # (1, TILE_B) lane-dense
    o_ref[...] = jax.nn.sigmoid(logits).astype(o_ref.dtype)


def _round_up(n, m):
    return ((n + m - 1) // m) * m


def pr_module_forward(x, weight, bias, *, tile_b=None):
    """x: (B, H); weight: (1, H) (PyTorch nn.Linear layout); bias: (1,). Returns (B,)."""
    B, H = x.shape
    x_item = jnp.dtype(x.dtype).itemsize
    out_dtype = x.dtype
    out_item = jnp.dtype(out_dtype).itemsize

    # Sublane granularity of the x block's second-minor dim depends on dtype packing.
    row_align = {4: 8, 2: 16, 1: 32}.get(x_item, 8)

    try:
        vmem_cap = int(pltpu.get_tpu_info().vmem_capacity_bytes)
    except Exception:
        vmem_cap = 64 * 1024 * 1024  # conservative (v7x per-TC VMEM)

    auto_tile = tile_b is None
    if auto_tile:
        # ~1/8 of physical VMEM per x block (double-buffered -> ~1/4), >= 4 MiB.
        block_bytes = max(4 << 20, vmem_cap // 8)
        rows = block_bytes // max(1, H * x_item)
        tile_b = max(row_align, (rows // row_align) * row_align)
        tile_b = min(tile_b, 8192)
        tile_b = min(tile_b, _round_up(B, row_align))

    num_tiles = pl.cdiv(B, tile_b)
    # v7x megacore: keep the "parallel" batch axis even (when multi-tile) so both
    # TensorCores stay busy instead of one idling on an odd tail tile.
    if auto_tile and num_tiles > 1 and num_tiles % 2 == 1:
        num_tiles += 1
        tile_b = max(row_align, _round_up(pl.cdiv(B, num_tiles), row_align))
        num_tiles = pl.cdiv(B, tile_b)

    # Weight row padded to 8 sublanes (tiny, one-time) so the MXU operand is a clean
    # (8, H) tile; rows 1..7 are zero and only row 0 of the result is used.
    w8 = jnp.zeros((8, H), dtype=x.dtype).at[0, :].set(weight.reshape(H).astype(x.dtype))
    b_smem = jnp.asarray(bias, jnp.float32).reshape(1, 1)

    # Explicit scoped-VMEM budget: 2x x-buffers + small out/weight buffers + slack,
    # clamped under physical VMEM (64 MiB v7x / 128 MiB v5e,v6e).
    x_block_bytes = tile_b * H * x_item
    vmem_limit = int(min(max(2 * x_block_bytes + (8 << 20), 16 << 20), vmem_cap - (4 << 20)))

    cost = pl.CostEstimate(
        flops=2 * B * H,
        transcendentals=B,
        bytes_accessed=B * H * x_item + 8 * H * x_item + B * out_item,
    )

    out = pl.pallas_call(
        _pr_kernel,
        out_shape=jax.ShapeDtypeStruct((num_tiles, tile_b), out_dtype),
        grid_spec=pl.GridSpec(
            grid=(num_tiles,),
            in_specs=[
                pl.BlockSpec((tile_b, H), lambda i: (i, 0)),   # streamed batch tile
                pl.BlockSpec((8, H), lambda i: (0, 0)),        # resident padded weight
                pl.BlockSpec(memory_space=pltpu.MemorySpace.SMEM),  # scalar bias
            ],
            out_specs=pl.BlockSpec((1, tile_b), lambda i: (i, 0)),  # lane-dense row / tile
        ),
        compiler_params=pltpu.CompilerParams(
            dimension_semantics=("parallel",),
            vmem_limit_bytes=vmem_limit,
        ),
        cost_estimate=cost,
    )(x, w8, b_smem)

    # Flatten tiles back to the batch axis and drop ragged tail rows (torch .view(B)).
    return out.reshape(num_tiles * tile_b)[:B]


if __name__ == "__main__":
    key = jax.random.PRNGKey(0)
    k_x, k_w, k_b = jax.random.split(key, 3)

    B, H = 8, 32  # batch, hidden_size

    x = jax.random.normal(k_x, (B, H), dtype=jnp.float32)
    # Deterministic parameter init (mimic nn.Linear uniform(-1/sqrt(H), 1/sqrt(H)))
    bound = 1.0 / (H ** 0.5)
    weight = jax.random.uniform(k_w, (1, H), minval=-bound, maxval=bound, dtype=jnp.float32)
    bias = jax.random.uniform(k_b, (1,), minval=-bound, maxval=bound, dtype=jnp.float32)

    y = pr_module_forward(x, weight, bias)
    jax.block_until_ready(y)

    y_ref = jax.nn.sigmoid(
        jnp.dot(x, weight.reshape(H), precision=jax.lax.Precision.HIGHEST) + bias[0]
    )
    assert y.shape == (B,)
    assert jnp.allclose(y, y_ref, atol=5e-5), (y, y_ref)

    # Also exercise the multi-tile + ragged-batch (no host pad) path with a tiny tile.
    B2 = 20
    x2 = jax.random.normal(k_x, (B2, H), dtype=jnp.float32)
    y2 = pr_module_forward(x2, weight, bias, tile_b=8)
    jax.block_until_ready(y2)
    y2_ref = jax.nn.sigmoid(
        jnp.dot(x2, weight.reshape(H), precision=jax.lax.Precision.HIGHEST) + bias[0]
    )
    assert y2.shape == (B2,)
    assert jnp.allclose(y2, y2_ref, atol=5e-5), (y2, y2_ref)

    print("KERNEL_OK")
</pallas_src>

<mosaic_0001>
module attributes {stable_mosaic.version = 11 : i64} {
  func.func @_pr_kernel(%arg0: i32, %arg1: memref<8x32xf32, #tpu.memory_space<vmem>>, %arg2: memref<8x32xf32, #tpu.memory_space<vmem>>, %arg3: memref<1x1xf32, #tpu.memory_space<smem>>, %arg4: memref<1x8xf32, #tpu.memory_space<vmem>>) attributes {dimension_semantics = [#tpu.dimension_semantics<parallel>], iteration_bounds = array<i64: 1>, scalar_prefetch = 0 : i64, scratch_operands = 0 : i64, tpu.core_type = #tpu.core_type<tc>, window_params = [{transform_indices = @transform_0, window_bounds = array<i64: 8, 32>}, {pipeline_mode = #tpu.pipeline_mode<synchronous>, transform_indices = @transform_1, window_bounds = array<i64: 8, 32>}, {transform_indices = @transform_2, window_bounds = array<i64: 1, 1>}, {transform_indices = @transform_3, window_bounds = array<i64: 1, 8>}]} {
    %c0 = arith.constant 0 : index
    %c0_0 = arith.constant 0 : index
    %0 = vector.load %arg2[%c0, %c0_0] : memref<8x32xf32, #tpu.memory_space<vmem>>, vector<8x32xf32>
    %c0_1 = arith.constant 0 : index
    %c0_2 = arith.constant 0 : index
    %1 = vector.load %arg1[%c0_1, %c0_2] : memref<8x32xf32, #tpu.memory_space<vmem>>, vector<8x32xf32>
    %cst = arith.constant dense<0.000000e+00> : vector<8x8xf32>
    %2 = tpu.matmul %0, %1, %cst {dimension_numbers = #tpu.dot_dimension_numbers<[1], [1], [0], [0], [0, 0, 1, 0], [], []>, precision = #tpu.contract_precision<fp32>} : vector<8x32xf32>, vector<8x32xf32>, vector<8x8xf32> -> vector<8x8xf32>
    %3 = vector.extract_strided_slice %2 {offsets = [0, 0], sizes = [1, 8], strides = [1, 1]} : vector<8x8xf32> to vector<1x8xf32>
    %c0_3 = arith.constant 0 : index
    %c0_4 = arith.constant 0 : index
    %4 = memref.load %arg3[%c0_3, %c0_4] : memref<1x1xf32, #tpu.memory_space<smem>>
    %5 = vector.broadcast %4 : f32 to vector<1x8xf32>
    %6 = arith.addf %3, %5 : vector<1x8xf32>
    %7 = arith.negf %6 : vector<1x8xf32>
    %8 = math.exp %7 : vector<1x8xf32>
    %cst_5 = arith.constant 1.000000e+00 : f32
    %9 = vector.broadcast %cst_5 : f32 to vector<1x8xf32>
    %10 = arith.addf %9, %8 : vector<1x8xf32>
    %11 = arith.divf %9, %10 : vector<1x8xf32>
    %c0_6 = arith.constant 0 : index
    %c0_7 = arith.constant 0 : index
    %12 = vector.load %arg4[%c0_6, %c0_7] : memref<1x8xf32, #tpu.memory_space<vmem>>, vector<1x8xf32>
    tpu.vector_store %arg4[%c0_6, %c0_7], %11 {strides = array<i32>} : memref<1x8xf32, #tpu.memory_space<vmem>>, vector<1x8xf32>,
    return
  }
  func.func @transform_0(%arg0: i32) -> (i32, i32) {
    %c0_i32 = arith.constant 0 : i32
    %c0_i32_0 = arith.constant 0 : i32
    return %arg0, %c0_i32 : i32, i32
  }
  func.func @transform_1(%arg0: i32) -> (i32, i32) {
    %c0_i32 = arith.constant 0 : i32
    %c0_i32_0 = arith.constant 0 : i32
    %c0_i32_1 = arith.constant 0 : i32
    return %c0_i32, %c0_i32_0 : i32, i32
  }
  func.func @transform_2(%arg0: i32) -> (i32, i32) {
    %c0_i32 = arith.constant 0 : i32
    %c0_i32_0 = arith.constant 0 : i32
    %c0_i32_1 = arith.constant 0 : i32
    return %c0_i32, %c0_i32_0 : i32, i32
  }
  func.func @transform_3(%arg0: i32) -> (i32, i32) {
    %c0_i32 = arith.constant 0 : i32
    %c0_i32_0 = arith.constant 0 : i32
    return %arg0, %c0_i32 : i32, i32
  }
}

</mosaic_0001>

<llo_original>
// kernel: tpu_custom_call.1
$region0: #{tpu_custom_call.1}
  #allocation0 [shape = 'u32[]', space=smem, size = 0x4, offset = 0x4, fixed_abs, tag = 'smem constant byte address 0x4 - core index']
  #allocation1 [shape = 'u32[144,128]{1,0:T(1,128)}', space=vmem, size = 0x12000, scoped, tag = 'internal scratch']
  #allocation2 [shape = 'f32[1,1]{1,0:T(1,128)S(6)}', space=smem, size = 0x200, scoped, tag = 'scoped memory for tpu_custom_call.1']
  %s0 = inlined_call_operand.hbm [shape: f32[8,32], index: 0, kind: input, shape index: {}]
  %s1 = inlined_call_operand.hbm [shape: f32[8,32], index: 1, kind: input, shape index: {}]
  %s2 = inlined_call_operand.<no memory space> [shape: f32[1,1], index: 2, kind: input, shape index: {}]
  %s3 = inlined_call_operand.hbm [shape: f32[1,8], index: 3, kind: output, shape index: {}]
  %s4 = sld [smem:[#allocation0]]
  $region30: #{tpu_custom_call.1} parent=0
    _
  %s6 = ssub.s32 1, %s4
  %s7 = scalar_select 0, %s6, %s4
  %8 = sst [smem:[#allocation2]] %s2
  $region1: #{tpu_custom_call.1} parent=0
    #allocation3 [shape = 'u8[4096]{0}', space=vmem, size = 0x1000, scoped, tag = 'input window, operand 0, single buffered']
    #allocation4 [shape = 's32[1]{0}', space=sflag, size = 0x4, scoped, tag = 'scoped memory for tpu_custom_call.1']
    #allocation5 [shape = 's32[1]{0}', space=sflag, size = 0x4, scoped, tag = 'scoped memory for tpu_custom_call.1']
    #allocation6 [shape = 'u8[4096]{0}', space=vmem, size = 0x1000, scoped, tag = 'input window, operand 1, single buffered']
    #allocation7 [shape = 's32[1]{0}', space=sflag, size = 0x4, scoped, tag = 'scoped memory for tpu_custom_call.1']
    #allocation8 [shape = 'u8[512]{0}', space=vmem, size = 0x400, scoped, tag = 'output window, operand 0, single buffered']
    %9 = vsyncpa [#allocation4], 0
    %10 = vsyncpa [#allocation7], 0
    %11 = vsyncpa [#allocation5], 0
    // Predicated region
    $region2: #{tpu_custom_call.1} parent=1 // pred_check
      _
    $region3: #{tpu_custom_call.1} parent=1 // pred_check_branch
      %13 = sbr.rel (0) target = $region5
    $region4: #{tpu_custom_call.1} parent=1 // pred_region
      %s15 = ssub.s32 128, 128
      %16 = vsyncadd [#allocation4], %s15
      %s18 = sshll.u32 [#allocation3], 4
      %s19 = int_to_ptr.vmem [resolvable:$true] %s18
      %21 = dma.hbm_to_vmem [thread:$0]  %s0, 128, %s19, [#allocation4]
    $region5: #{tpu_custom_call.1} parent=1 // pred_fallthru
      _
    // Predicated region
    $region6: #{tpu_custom_call.1} parent=1 // pred_check
      _
    $region7: #{tpu_custom_call.1} parent=1 // pred_check_branch
      %23 = sbr.rel (0) target = $region9
    $region8: #{tpu_custom_call.1} parent=1 // pred_region
      %s25 = ssub.s32 128, 128
      %26 = vsyncadd [#allocation7], %s25
      %s28 = sshll.u32 [#allocation6], 4
      %s29 = int_to_ptr.vmem [resolvable:$true] %s28
      %31 = dma.hbm_to_vmem [thread:$0]  %s1, 128, %s29, [#allocation7]
    $region9: #{tpu_custom_call.1} parent=1 // pred_fallthru
      _
    // Predicated region
    $region10: #{tpu_custom_call.1} parent=1 // pred_check
      _
    $region11: #{tpu_custom_call.1} parent=1 // pred_check_branch
      %33 = sbr.rel (0) target = $region13
    $region12: #{tpu_custom_call.1} parent=1 // pred_region
      _
    $region13: #{tpu_custom_call.1} parent=1 // pred_fallthru
      _
    // Predicated region
    $region14: #{tpu_custom_call.1} parent=1 // pred_check
      _
    $region15: #{tpu_custom_call.1} parent=1 // pred_check_branch
      %35 = sbr.rel (0) target = $region17
    $region16: #{tpu_custom_call.1} parent=1 // pred_region
      %36 = dma.done [#allocation4], 128
    $region17: #{tpu_custom_call.1} parent=1 // pred_fallthru
      _
    // Predicated region
    $region18: #{tpu_custom_call.1} parent=1 // pred_check
      _
    $region19: #{tpu_custom_call.1} parent=1 // pred_check_branch
      %38 = sbr.rel (0) target = $region21
    $region20: #{tpu_custom_call.1} parent=1 // pred_region
      %39 = dma.done [#allocation7], 128
    $region21: #{tpu_custom_call.1} parent=1 // pred_fallthru
      _
    %v40 = vld [vmem:[#allocation6] sm:$0xff]
    %v41 = vld [vmem:[#allocation3] sm:$0xff]
    %vm42 = vcmask 261120
    %v44 = vsel %vm42, %v40, 0
    %v47 = vsel %vm42, %v41, 0
    %49 = vmatprep.subr.mxu0 0.0
    %v50 = vand.u32 %v47, 4294901760
    %51 = vmatpush1.xpose.msra.mxu0 %v50
    %52 = vmatprep.subr.mxu0 0.0
    %53 = vmatpush1.xpose.msra.mxu0 0.0
    %54 = vmatprep.subr.mxu0 0.0
    %55 = vmatpush1.xpose.msra.mxu0 0.0
    %56 = vmatprep.subr.mxu0 0.0
    %57 = vmatpush1.xpose.msra.mxu0 0.0
    %58 = vmatprep.subr.mxu0 0.0
    %59 = vmatpush1.xpose.msra.mxu0 0.0
    %60 = vmatprep.subr.mxu0 0.0
    %61 = vmatpush1.xpose.msra.mxu0 0.0
    %62 = vmatprep.subr.mxu0 0.0
    %63 = vmatpush1.xpose.msra.mxu0 0.0
    %64 = vmatprep.subr.mxu0 0.0
    %65 = vmatpush1.xpose.msra.mxu0 0.0
    %66 = vmatprep.subr.mxu0 0.0
    %67 = vmatpush1.xpose.msra.mxu0 0.0
    %68 = vmatprep.subr.mxu0 0.0
    %69 = vmatpush1.xpose.msra.mxu0 0.0
    %70 = vmatprep.subr.mxu0 0.0
    %71 = vmatpush1.xpose.msra.mxu0 0.0
    %72 = vmatprep.subr.mxu0 0.0
    %73 = vmatpush1.xpose.msra.mxu0 0.0
    %74 = vmatprep.subr.mxu0 0.0
    %75 = vmatpush1.xpose.msra.mxu0 0.0
    %76 = vmatprep.subr.mxu0 0.0
    %77 = vmatpush1.xpose.msra.mxu0 0.0
    %78 = vmatprep.subr.mxu0 0.0
    %79 = vmatpush1.xpose.msra.mxu0 0.0
    %80 = vmatprep.subr.mxu0 0.0
    %81 = vmatpush1.xpose.msra.mxu0 0.0
    %82 = vmatprep.subr.mxu0 0.0
    %83 = vmatpush1.xpose.msra.mxu0 0.0
    %84 = vmatprep.subr.mxu0 0.0
    %85 = vmatpush1.xpose.msra.mxu0 0.0
    %86 = vmatprep.subr.mxu0 0.0
    %87 = vmatpush1.xpose.msra.mxu0 0.0
    %88 = vmatprep.subr.mxu0 0.0
    %89 = vmatpush1.xpose.msra.mxu0 0.0
    %90 = vmatprep.subr.mxu0 0.0
    %91 = vmatpush1.xpose.msra.mxu0 0.0
    %92 = vmatprep.subr.mxu0 0.0
    %93 = vmatpush1.xpose.msra.mxu0 0.0
    %94 = vmatprep.subr.mxu0 0.0
    %95 = vmatpush1.xpose.msra.mxu0 0.0
    %96 = vmatprep.subr.mxu0 0.0
    %97 = vmatpush1.xpose.msra.mxu0 0.0
    %98 = vmatprep.subr.mxu0 0.0
    %99 = vmatpush1.xpose.msra.mxu0 0.0
    %100 = vmatprep.subr.mxu0 0.0
    %101 = vmatpush1.xpose.msra.mxu0 0.0
    %102 = vmatprep.subr.mxu0 0.0
    %103 = vmatpush1.xpose.msra.mxu0 0.0
    %104 = vmatprep.subr.mxu0 0.0
    %105 = vmatpush1.xpose.msra.mxu0 0.0
    %106 = vmatprep.subr.mxu0 0.0
    %107 = vmatpush1.xpose.msra.mxu0 0.0
    %108 = vmatprep.subr.mxu0 0.0
    %109 = vmatpush1.xpose.msra.mxu0 0.0
    %110 = vmatprep.subr.mxu0 0.0
    %111 = vmatpush1.xpose.msra.mxu0 0.0
    %112 = vmatprep.subr.mxu0 0.0
    %113 = vmatpush1.xpose.msra.mxu0 0.0
    %114 = vmatprep.mubr.f32.mxu0 0.0
    %v115 = vand.u32 %v44, 4294901760
    %v116 = vsub.f32 %v44, %v115
    %v117 = vand.u32 %v116, 4294901760
    %v118 = vsub.f32 %v116, %v117
    %v119 = vand.u32 %v118, 4294901760
    %120 = vmatmul.mubr.f32.gmra.mrb[0].mxu0 %v119
    %v121 = vpop.f32.mrb[0].mxu0
    %v122 = vadd.f32 0.0, %v121
    %v123 = vpop.f32.mrb[0].mxu0
    %124 = vdwg.mxu0
    %125 = vmatprep.subr.mxu0 0.0
    %v126 = vand.u32 %v47, 4294901760
    %v127 = vsub.f32 %v47, %v126
    %v128 = vand.u32 %v127, 4294901760
    %v129 = vsub.f32 %v127, %v128
    %v130 = vand.u32 %v129, 4294901760
    %131 = vmatpush1.xpose.msra.mxu0 %v130
    %132 = vmatprep.subr.mxu0 0.0
    %133 = vmatpush1.xpose.msra.mxu0 0.0
    %134 = vmatprep.subr.mxu0 0.0
    %135 = vmatpush1.xpose.msra.mxu0 0.0
    %136 = vmatprep.subr.mxu0 0.0
    %137 = vmatpush1.xpose.msra.mxu0 0.0
    %138 = vmatprep.subr.mxu0 0.0
    %139 = vmatpush1.xpose.msra.mxu0 0.0
    %140 = vmatprep.subr.mxu0 0.0
    %141 = vmatpush1.xpose.msra.mxu0 0.0
    %142 = vmatprep.subr.mxu0 0.0
    %143 = vmatpush1.xpose.msra.mxu0 0.0
    %144 = vmatprep.subr.mxu0 0.0
    %145 = vmatpush1.xpose.msra.mxu0 0.0
    %146 = vmatprep.subr.mxu0 0.0
    %147 = vmatpush1.xpose.msra.mxu0 0.0
    %148 = vmatprep.subr.mxu0 0.0
    %149 = vmatpush1.xpose.msra.mxu0 0.0
    %150 = vmatprep.subr.mxu0 0.0
    %151 = vmatpush1.xpose.msra.mxu0 0.0
    %152 = vmatprep.subr.mxu0 0.0
    %153 = vmatpush1.xpose.msra.mxu0 0.0
    %154 = vmatprep.subr.mxu0 0.0
    %155 = vmatpush1.xpose.msra.mxu0 0.0
    %156 = vmatprep.subr.mxu0 0.0
    %157 = vmatpush1.xpose.msra.mxu0 0.0
    %158 = vmatprep.subr.mxu0 0.0
    %159 = vmatpush1.xpose.msra.mxu0 0.0
    %160 = vmatprep.subr.mxu0 0.0
    %161 = vmatpush1.xpose.msra.mxu0 0.0
    %162 = vmatprep.subr.mxu0 0.0
    %163 = vmatpush1.xpose.msra.mxu0 0.0
    %164 = vmatprep.subr.mxu0 0.0
    %165 = vmatpush1.xpose.msra.mxu0 0.0
    %166 = vmatprep.subr.mxu0 0.0
    %167 = vmatpush1.xpose.msra.mxu0 0.0
    %168 = vmatprep.subr.mxu0 0.0
    %169 = vmatpush1.xpose.msra.mxu0 0.0
    %170 = vmatprep.subr.mxu0 0.0
    %171 = vmatpush1.xpose.msra.mxu0 0.0
    %172 = vmatprep.subr.mxu0 0.0
    %173 = vmatpush1.xpose.msra.mxu0 0.0
    %174 = vmatprep.subr.mxu0 0.0
    %175 = vmatpush1.xpose.msra.mxu0 0.0
    %176 = vmatprep.subr.mxu0 0.0
    %177 = vmatpush1.xpose.msra.mxu0 0.0
    %178 = vmatprep.subr.mxu0 0.0
    %179 = vmatpush1.xpose.msra.mxu0 0.0
    %180 = vmatprep.subr.mxu0 0.0
    %181 = vmatpush1.xpose.msra.mxu0 0.0
    %182 = vmatprep.subr.mxu0 0.0
    %183 = vmatpush1.xpose.msra.mxu0 0.0
    %184 = vmatprep.subr.mxu0 0.0
    %185 = vmatpush1.xpose.msra.mxu0 0.0
    %186 = vmatprep.subr.mxu0 0.0
    %187 = vmatpush1.xpose.msra.mxu0 0.0
    %188 = vmatprep.subr.mxu0 0.0
    %189 = vmatpush1.xpose.msra.mxu0 0.0
    %190 = vmatprep.subr.mxu0 0.0
    %191 = vmatpush1.xpose.msra.mxu0 0.0
    %192 = vmatprep.subr.mxu0 0.0
    %193 = vmatpush1.xpose.msra.mxu0 0.0
    %194 = vmatprep.mubr.f32.mxu0 0.0
    %v195 = vand.u32 %v44, 4294901760
    %196 = vmatmul.mubr.f32.gmra.mrb[0].mxu0 %v195
    %v197 = vpop.f32.mrb[0].mxu0
    %v198 = vadd.f32 %v122, %v197
    %v199 = vpop.f32.mrb[0].mxu0
    %200 = vdwg.mxu0
    %201 = vmatprep.subr.mxu0 0.0
    %v202 = vand.u32 %v47, 4294901760
    %v203 = vsub.f32 %v47, %v202
    %204 = vmatpush1.xpose.msra.mxu0 %v203
    %205 = vmatprep.subr.mxu0 0.0
    %206 = vmatpush1.xpose.msra.mxu0 0.0
    %207 = vmatprep.subr.mxu0 0.0
    %208 = vmatpush1.xpose.msra.mxu0 0.0
    %209 = vmatprep.subr.mxu0 0.0
    %210 = vmatpush1.xpose.msra.mxu0 0.0
    %211 = vmatprep.subr.mxu0 0.0
    %212 = vmatpush1.xpose.msra.mxu0 0.0
    %213 = vmatprep.subr.mxu0 0.0
    %214 = vmatpush1.xpose.msra.mxu0 0.0
    %215 = vmatprep.subr.mxu0 0.0
    %216 = vmatpush1.xpose.msra.mxu0 0.0
    %217 = vmatprep.subr.mxu0 0.0
    %218 = vmatpush1.xpose.msra.mxu0 0.0
    %219 = vmatprep.subr.mxu0 0.0
    %220 = vmatpush1.xpose.msra.mxu0 0.0
    %221 = vmatprep.subr.mxu0 0.0
    %222 = vmatpush1.xpose.msra.mxu0 0.0
    %223 = vmatprep.subr.mxu0 0.0
    %224 = vmatpush1.xpose.msra.mxu0 0.0
    %225 = vmatprep.subr.mxu0 0.0
    %226 = vmatpush1.xpose.msra.mxu0 0.0
    %227 = vmatprep.subr.mxu0 0.0
    %228 = vmatpush1.xpose.msra.mxu0 0.0
    %229 = vmatprep.subr.mxu0 0.0
    %230 = vmatpush1.xpose.msra.mxu0 0.0
    %231 = vmatprep.subr.mxu0 0.0
    %232 = vmatpush1.xpose.msra.mxu0 0.0
    %233 = vmatprep.subr.mxu0 0.0
    %234 = vmatpush1.xpose.msra.mxu0 0.0
    %235 = vmatprep.subr.mxu0 0.0
    %236 = vmatpush1.xpose.msra.mxu0 0.0
    %237 = vmatprep.subr.mxu0 0.0
    %238 = vmatpush1.xpose.msra.mxu0 0.0
    %239 = vmatprep.subr.mxu0 0.0
    %240 = vmatpush1.xpose.msra.mxu0 0.0
    %241 = vmatprep.subr.mxu0 0.0
    %242 = vmatpush1.xpose.msra.mxu0 0.0
    %243 = vmatprep.subr.mxu0 0.0
    %244 = vmatpush1.xpose.msra.mxu0 0.0
    %245 = vmatprep.subr.mxu0 0.0
    %246 = vmatpush1.xpose.msra.mxu0 0.0
    %247 = vmatprep.subr.mxu0 0.0
    %248 = vmatpush1.xpose.msra.mxu0 0.0
    %249 = vmatprep.subr.mxu0 0.0
    %250 = vmatpush1.xpose.msra.mxu0 0.0
    %251 = vmatprep.subr.mxu0 0.0
    %252 = vmatpush1.xpose.msra.mxu0 0.0
    %253 = vmatprep.subr.mxu0 0.0
    %254 = vmatpush1.xpose.msra.mxu0 0.0
    %255 = vmatprep.subr.mxu0 0.0
    %256 = vmatpush1.xpose.msra.mxu0 0.0
    %257 = vmatprep.subr.mxu0 0.0
    %258 = vmatpush1.xpose.msra.mxu0 0.0
    %259 = vmatprep.subr.mxu0 0.0
    %260 = vmatpush1.xpose.msra.mxu0 0.0
    %261 = vmatprep.subr.mxu0 0.0
    %262 = vmatpush1.xpose.msra.mxu0 0.0
    %263 = vmatprep.subr.mxu0 0.0
    %264 = vmatpush1.xpose.msra.mxu0 0.0
    %265 = vmatprep.subr.mxu0 0.0
    %266 = vmatpush1.xpose.msra.mxu0 0.0
    %267 = vmatprep.mubr.f32.mxu0 0.0
    %v268 = vand.u32 %v44, 4294901760
    %v269 = vsub.f32 %v44, %v268
    %270 = vmatmul.mubr.f32.gmra.mrb[0].mxu0 %v269
    %v271 = vpop.f32.mrb[0].mxu0
    %v272 = vadd.f32 %v198, %v271
    %v273 = vpop.f32.mrb[0].mxu0
    %274 = vdwg.mxu0
    %275 = vmatprep.subr.mxu0 0.0
    %v276 = vand.u32 %v47, 4294901760
    %277 = vmatpush1.xpose.msra.mxu0 %v276
    %278 = vmatprep.subr.mxu0 0.0
    %279 = vmatpush1.xpose.msra.mxu0 0.0
    %280 = vmatprep.subr.mxu0 0.0
    %281 = vmatpush1.xpose.msra.mxu0 0.0
    %282 = vmatprep.subr.mxu0 0.0
    %283 = vmatpush1.xpose.msra.mxu0 0.0
    %284 = vmatprep.subr.mxu0 0.0
    %285 = vmatpush1.xpose.msra.mxu0 0.0
    %286 = vmatprep.subr.mxu0 0.0
    %287 = vmatpush1.xpose.msra.mxu0 0.0
    %288 = vmatprep.subr.mxu0 0.0
    %289 = vmatpush1.xpose.msra.mxu0 0.0
    %290 = vmatprep.subr.mxu0 0.0
    %291 = vmatpush1.xpose.msra.mxu0 0.0
    %292 = vmatprep.subr.mxu0 0.0
    %293 = vmatpush1.xpose.msra.mxu0 0.0
    %294 = vmatprep.subr.mxu0 0.0
    %295 = vmatpush1.xpose.msra.mxu0 0.0
    %296 = vmatprep.subr.mxu0 0.0
    %297 = vmatpush1.xpose.msra.mxu0 0.0
    %298 = vmatprep.subr.mxu0 0.0
    %299 = vmatpush1.xpose.msra.mxu0 0.0
    %300 = vmatprep.subr.mxu0 0.0
    %301 = vmatpush1.xpose.msra.mxu0 0.0
    %302 = vmatprep.subr.mxu0 0.0
    %303 = vmatpush1.xpose.msra.mxu0 0.0
    %304 = vmatprep.subr.mxu0 0.0
    %305 = vmatpush1.xpose.msra.mxu0 0.0
    %306 = vmatprep.subr.mxu0 0.0
    %307 = vmatpush1.xpose.msra.mxu0 0.0
    %308 = vmatprep.subr.mxu0 0.0
    %309 = vmatpush1.xpose.msra.mxu0 0.0
    %310 = vmatprep.subr.mxu0 0.0
    %311 = vmatpush1.xpose.msra.mxu0 0.0
    %312 = vmatprep.subr.mxu0 0.0
    %313 = vmatpush1.xpose.msra.mxu0 0.0
    %314 = vmatprep.subr.mxu0 0.0
    %315 = vmatpush1.xpose.msra.mxu0 0.0
    %316 = vmatprep.subr.mxu0 0.0
    %317 = vmatpush1.xpose.msra.mxu0 0.0
    %318 = vmatprep.subr.mxu0 0.0
    %319 = vmatpush1.xpose.msra.mxu0 0.0
    %320 = vmatprep.subr.mxu0 0.0
    %321 = vmatpush1.xpose.msra.mxu0 0.0
    %322 = vmatprep.subr.mxu0 0.0
    %323 = vmatpush1.xpose.msra.mxu0 0.0
    %324 = vmatprep.subr.mxu0 0.0
    %325 = vmatpush1.xpose.msra.mxu0 0.0
    %326 = vmatprep.subr.mxu0 0.0
    %327 = vmatpush1.xpose.msra.mxu0 0.0
    %328 = vmatprep.subr.mxu0 0.0
    %329 = vmatpush1.xpose.msra.mxu0 0.0
    %330 = vmatprep.subr.mxu0 0.0
    %331 = vmatpush1.xpose.msra.mxu0 0.0
    %332 = vmatprep.subr.mxu0 0.0
    %333 = vmatpush1.xpose.msra.mxu0 0.0
    %334 = vmatprep.subr.mxu0 0.0
    %335 = vmatpush1.xpose.msra.mxu0 0.0
    %336 = vmatprep.subr.mxu0 0.0
    %337 = vmatpush1.xpose.msra.mxu0 0.0
    %338 = vmatprep.subr.mxu0 0.0
    %339 = vmatpush1.xpose.msra.mxu0 0.0
    %340 = vmatprep.mubr.f32.mxu0 0.0
    %v341 = vand.u32 %v44, 4294901760
    %v342 = vsub.f32 %v44, %v341
    %v343 = vand.u32 %v342, 4294901760
    %344 = vmatmul.mubr.f32.gmra.mrb[0].mxu0 %v343
    %v345 = vpop.f32.mrb[0].mxu0
    %v346 = vadd.f32 %v272, %v345
    %v347 = vpop.f32.mrb[0].mxu0
    %348 = vdwg.mxu0
    %349 = vmatprep.subr.mxu0 0.0
    %v350 = vand.u32 %v47, 4294901760
    %v351 = vsub.f32 %v47, %v350
    %v352 = vand.u32 %v351, 4294901760
    %353 = vmatpush1.xpose.msra.mxu0 %v352
    %354 = vmatprep.subr.mxu0 0.0
    %355 = vmatpush1.xpose.msra.mxu0 0.0
    %356 = vmatprep.subr.mxu0 0.0
    %357 = vmatpush1.xpose.msra.mxu0 0.0
    %358 = vmatprep.subr.mxu0 0.0
    %359 = vmatpush1.xpose.msra.mxu0 0.0
    %360 = vmatprep.subr.mxu0 0.0
    %361 = vmatpush1.xpose.msra.mxu0 0.0
    %362 = vmatprep.subr.mxu0 0.0
    %363 = vmatpush1.xpose.msra.mxu0 0.0
    %364 = vmatprep.subr.mxu0 0.0
    %365 = vmatpush1.xpose.msra.mxu0 0.0
    %366 = vmatprep.subr.mxu0 0.0
    %367 = vmatpush1.xpose.msra.mxu0 0.0
    %368 = vmatprep.subr.mxu0 0.0
    %369 = vmatpush1.xpose.msra.mxu0 0.0
    %370 = vmatprep.subr.mxu0 0.0
    %371 = vmatpush1.xpose.msra.mxu0 0.0
    %372 = vmatprep.subr.mxu0 0.0
    %373 = vmatpush1.xpose.msra.mxu0 0.0
    %374 = vmatprep.subr.mxu0 0.0
    %375 = vmatpush1.xpose.msra.mxu0 0.0
    %376 = vmatprep.subr.mxu0 0.0
    %377 = vmatpush1.xpose.msra.mxu0 0.0
    %378 = vmatprep.subr.mxu0 0.0
    %379 = vmatpush1.xpose.msra.mxu0 0.0
    %380 = vmatprep.subr.mxu0 0.0
    %381 = vmatpush1.xpose.msra.mxu0 0.0
    %382 = vmatprep.subr.mxu0 0.0
    %383 = vmatpush1.xpose.msra.mxu0 0.0
    %384 = vmatprep.subr.mxu0 0.0
    %385 = vmatpush1.xpose.msra.mxu0 0.0
    %386 = vmatprep.subr.mxu0 0.0
    %387 = vmatpush1.xpose.msra.mxu0 0.0
    %388 = vmatprep.subr.mxu0 0.0
    %389 = vmatpush1.xpose.msra.mxu0 0.0
    %390 = vmatprep.subr.mxu0 0.0
    %391 = vmatpush1.xpose.msra.mxu0 0.0
    %392 = vmatprep.subr.mxu0 0.0
    %393 = vmatpush1.xpose.msra.mxu0 0.0
    %394 = vmatprep.subr.mxu0 0.0
    %395 = vmatpush1.xpose.msra.mxu0 0.0
    %396 = vmatprep.subr.mxu0 0.0
    %397 = vmatpush1.xpose.msra.mxu0 0.0
    %398 = vmatprep.subr.mxu0 0.0
    %399 = vmatpush1.xpose.msra.mxu0 0.0
    %400 = vmatprep.subr.mxu0 0.0
    %401 = vmatpush1.xpose.msra.mxu0 0.0
    %402 = vmatprep.subr.mxu0 0.0
    %403 = vmatpush1.xpose.msra.mxu0 0.0
    %404 = vmatprep.subr.mxu0 0.0
    %405 = vmatpush1.xpose.msra.mxu0 0.0
    %406 = vmatprep.subr.mxu0 0.0
    %407 = vmatpush1.xpose.msra.mxu0 0.0
    %408 = vmatprep.subr.mxu0 0.0
    %409 = vmatpush1.xpose.msra.mxu0 0.0
    %410 = vmatprep.subr.mxu0 0.0
    %411 = vmatpush1.xpose.msra.mxu0 0.0
    %412 = vmatprep.subr.mxu0 0.0
    %413 = vmatpush1.xpose.msra.mxu0 0.0
    %414 = vmatprep.subr.mxu0 0.0
    %415 = vmatpush1.xpose.msra.mxu0 0.0
    %416 = vmatprep.mubr.f32.mxu0 0.0
    %v417 = vand.u32 %v44, 4294901760
    %418 = vmatmul.mubr.f32.gmra.mrb[0].mxu0 %v417
    %v419 = vpop.f32.mrb[0].mxu0
    %v420 = vadd.f32 %v346, %v419
    %v421 = vpop.f32.mrb[0].mxu0
    %422 = vdwg.mxu0
    %423 = vmatprep.subr.mxu0 0.0
    %v424 = vand.u32 %v47, 4294901760
    %425 = vmatpush1.xpose.msra.mxu0 %v424
    %426 = vmatprep.subr.mxu0 0.0
    %427 = vmatpush1.xpose.msra.mxu0 0.0
    %428 = vmatprep.subr.mxu0 0.0
    %429 = vmatpush1.xpose.msra.mxu0 0.0
    %430 = vmatprep.subr.mxu0 0.0
    %431 = vmatpush1.xpose.msra.mxu0 0.0
    %432 = vmatprep.subr.mxu0 0.0
    %433 = vmatpush1.xpose.msra.mxu0 0.0
    %434 = vmatprep.subr.mxu0 0.0
    %435 = vmatpush1.xpose.msra.mxu0 0.0
    %436 = vmatprep.subr.mxu0 0.0
    %437 = vmatpush1.xpose.msra.mxu0 0.0
    %438 = vmatprep.subr.mxu0 0.0
    %439 = vmatpush1.xpose.msra.mxu0 0.0
    %440 = vmatprep.subr.mxu0 0.0
    %441 = vmatpush1.xpose.msra.mxu0 0.0
    %442 = vmatprep.subr.mxu0 0.0
    %443 = vmatpush1.xpose.msra.mxu0 0.0
    %444 = vmatprep.subr.mxu0 0.0
    %445 = vmatpush1.xpose.msra.mxu0 0.0
    %446 = vmatprep.subr.mxu0 0.0
    %447 = vmatpush1.xpose.msra.mxu0 0.0
    %448 = vmatprep.subr.mxu0 0.0
    %449 = vmatpush1.xpose.msra.mxu0 0.0
    %450 = vmatprep.subr.mxu0 0.0
    %451 = vmatpush1.xpose.msra.mxu0 0.0
    %452 = vmatprep.subr.mxu0 0.0
    %453 = vmatpush1.xpose.msra.mxu0 0.0
    %454 = vmatprep.subr.mxu0 0.0
    %455 = vmatpush1.xpose.msra.mxu0 0.0
    %456 = vmatprep.subr.mxu0 0.0
    %457 = vmatpush1.xpose.msra.mxu0 0.0
    %458 = vmatprep.subr.mxu0 0.0
    %459 = vmatpush1.xpose.msra.mxu0 0.0
    %460 = vmatprep.subr.mxu0 0.0
    %461 = vmatpush1.xpose.msra.mxu0 0.0
    %462 = vmatprep.subr.mxu0 0.0
    %463 = vmatpush1.xpose.msra.mxu0 0.0
    %464 = vmatprep.subr.mxu0 0.0
    %465 = vmatpush1.xpose.msra.mxu0 0.0
    %466 = vmatprep.subr.mxu0 0.0
    %467 = vmatpush1.xpose.msra.mxu0 0.0
    %468 = vmatprep.subr.mxu0 0.0
    %469 = vmatpush1.xpose.msra.mxu0 0.0
    %470 = vmatprep.subr.mxu0 0.0
    %471 = vmatpush1.xpose.msra.mxu0 0.0
    %472 = vmatprep.subr.mxu0 0.0
    %473 = vmatpush1.xpose.msra.mxu0 0.0
    %474 = vmatprep.subr.mxu0 0.0
    %475 = vmatpush1.xpose.msra.mxu0 0.0
    %476 = vmatprep.subr.mxu0 0.0
    %477 = vmatpush1.xpose.msra.mxu0 0.0
    %478 = vmatprep.subr.mxu0 0.0
    %479 = vmatpush1.xpose.msra.mxu0 0.0
    %480 = vmatprep.subr.mxu0 0.0
    %481 = vmatpush1.xpose.msra.mxu0 0.0
    %482 = vmatprep.subr.mxu0 0.0
    %483 = vmatpush1.xpose.msra.mxu0 0.0
    %484 = vmatprep.subr.mxu0 0.0
    %485 = vmatpush1.xpose.msra.mxu0 0.0
    %486 = vmatprep.subr.mxu0 0.0
    %487 = vmatpush1.xpose.msra.mxu0 0.0
    %488 = vmatprep.mubr.f32.mxu0 0.0
    %v489 = vand.u32 %v44, 4294901760
    %490 = vmatmul.mubr.f32.gmra.mrb[0].mxu0 %v489
    %v491 = vpop.f32.mrb[0].mxu0
    %v492 = vadd.f32 %v420, %v491
    %v493 = vpop.f32.mrb[0].mxu0
    %494 = vdwg.mxu0
    %s495 = sld [smem:[#allocation2]]
    %v496 = vstv %s495
    %v497 = vadd.f32 %v492, %v496
    %v498 = vxor.u32 %v497, 2147483648
    %v499 = vmul.f32 %v498, 1.442695
    %v500 = vpow.pop %v499
    %v501 = vadd.f32 %v500, 1.0
    %v502 = vrcp.pop %v501
    %v503 = vmul.f32 1.0, %v502
    %vm504 = vcmask 57344
    %505 = vst.msk [vmem:[#allocation8] sm:$0x1] %vm504, %v503
    // Predicated region
    $region22: #{tpu_custom_call.1} parent=1 // pred_check
      _
    $region23: #{tpu_custom_call.1} parent=1 // pred_check_branch
      %507 = sbr.rel (0) target = $region25
    $region24: #{tpu_custom_call.1} parent=1 // pred_region
      %s509 = ssub.s32 16, 16
      %510 = vsyncadd [#allocation5], %s509
      %s512 = sshll.u32 [#allocation8], 4
      %s513 = int_to_ptr.vmem [resolvable:$true] %s512
      %515 = dma.vmem_to_hbm [thread:$0]  %s513, 16, %s3, [#allocation5]
    $region25: #{tpu_custom_call.1} parent=1 // pred_fallthru
      _
    // Predicated region
    $region26: #{tpu_custom_call.1} parent=1 // pred_check
      _
    $region27: #{tpu_custom_call.1} parent=1 // pred_check_branch
      %517 = sbr.rel (0) target = $region29
    $region28: #{tpu_custom_call.1} parent=1 // pred_region
      %518 = dma.done [#allocation5], 16
    $region29: #{tpu_custom_call.1} parent=1 // pred_fallthru
      _
    %519 = vsyncpa [#allocation4], 1
    %520 = vsyncpa [#allocation7], 1
    %521 = vsyncpa [#allocation5], 1

</llo_original>
